<compile_context>
chip_gen: v7x
topology: tpu7x:2x2x1
jax: 0.10.0
libtpu: 0.0.40
codegen_flags: <defaults>
</compile_context>

<pallas_src>
import functools

import jax
import jax.numpy as jnp
from jax.experimental import pallas as pl
from jax.experimental.pallas import tpu as pltpu


# ---------------------------------------------------------------------------
# Literal character_GraphConvolution.forward:  output = spmm(adj, input)
# TODO(synk): torch.spmm takes a sparse adjacency; on TPU we use the dense
#             row-major adjacency and a plain MXU matmul.
# ---------------------------------------------------------------------------
def _gc_kernel(inp_ref, adj_ref, out_ref):
    out_ref[...] = jnp.dot(adj_ref[...], inp_ref[...],
                           preferred_element_type=jnp.float32)


def character_graph_convolution(inp, adj):
    N = adj.shape[0]
    F = inp.shape[1]
    return pl.pallas_call(
        _gc_kernel,
        out_shape=jax.ShapeDtypeStruct((N, F), jnp.float32),
        in_specs=[
            pl.BlockSpec(memory_space=pltpu.MemorySpace.VMEM),
            pl.BlockSpec(memory_space=pltpu.MemorySpace.VMEM),
        ],
        out_specs=pl.BlockSpec(memory_space=pltpu.MemorySpace.VMEM),
    )(inp, adj)


# ---------------------------------------------------------------------------
# Fused BasePUP forward:
#   x = dropout(tanh(adj @ (feature @ W) + b))           (encode, VMEM-resident)
#   gather 7*B rows of x via one-hot selection matmul    (no per-sample DMAs)
#   pred_p / pred_n = FM(global halves) + alpha * FM(category halves)
# Single grid point, full-array VMEM blocks (shapes are small), two (B,1)
# outputs written once each.
# ---------------------------------------------------------------------------
def _fused_kernel(seed_ref, idx_ref, feat_ref, adj_ref, w_ref, b_ref,
                  out_p_ref, out_n_ref, *, dropout, alpha, split_dim, B, N):
    # ----- encode -----
    support = jnp.dot(feat_ref[...], w_ref[...],
                      preferred_element_type=jnp.float32)          # (N, H)
    pre = jnp.dot(adj_ref[...], support,
                  preferred_element_type=jnp.float32) + b_ref[...]  # gc + bias
    x = jnp.tanh(pre)
    if dropout > 0.0:
        # inverted dropout, F.dropout(training=True) semantics; integer
        # threshold compare on raw bits (keep iff bits >= dropout * 2^32).
        pltpu.prng_seed(seed_ref[0])
        bits = pltpu.bitcast(pltpu.prng_random_bits(x.shape), jnp.uint32)
        thresh = jnp.uint32(min(int(round(dropout * 4294967296.0)), 4294967295))
        x = jnp.where(bits >= thresh, x * (1.0 / (1.0 - dropout)), 0.0)

    # ----- gather all 7*B rows at once: one-hot selection matmul -----
    idx = idx_ref[...]                                              # (7B, 1) int32
    node = jax.lax.broadcasted_iota(jnp.int32, (7 * B, N), 1)       # (7B, N)
    sel = jnp.where(node == idx, 1.0, 0.0)                          # (7B, N) f32
    g = jnp.dot(sel, x, preferred_element_type=jnp.float32)         # (7B, H)

    ue  = g[0 * B:1 * B]   # user
    ip_ = g[1 * B:2 * B]   # item (pos)
    cp_ = g[2 * B:3 * B]   # cat  (pos)
    pp_ = g[3 * B:4 * B]   # price(pos)
    in_ = g[4 * B:5 * B]   # item (neg)
    cn_ = g[5 * B:6 * B]   # cat  (neg)
    pn_ = g[6 * B:7 * B]   # price(neg)

    def fm(a, b, c):
        s = a + b + c
        ssq = a * a + b * b + c * c
        return jnp.sum(0.5 * (s * s - ssq), axis=1, keepdims=True)  # (B, 1)

    def decode(it, ct, pt):
        glob = fm(ue[:, :split_dim], it[:, :split_dim], pt[:, :split_dim])
        catg = fm(ue[:, split_dim:], ct[:, split_dim:], pt[:, split_dim:])
        return glob + alpha * catg

    out_p_ref[...] = decode(ip_, cp_, pp_)                          # one store
    out_n_ref[...] = decode(in_, cn_, pn_)                          # one store


def base_pup_forward(params, feature, adj, user, item_p, item_n,
                     cat_p, cat_n, price_p, price_n, *,
                     dropout, alpha, split_dim, seed):
    N = adj.shape[0]
    B = user.shape[0]
    # stack all index vectors -> (7B, 1) so the kernel gathers with a single
    # selection matmul (wrapper-side reshape is free layout plumbing).
    idx = jnp.concatenate(
        [user, item_p, cat_p, price_p, item_n, cat_n, price_n]
    ).astype(jnp.int32).reshape(7 * B, 1)

    out_p, out_n = pl.pallas_call(
        functools.partial(_fused_kernel, dropout=dropout, alpha=alpha,
                          split_dim=split_dim, B=B, N=N),
        out_shape=(jax.ShapeDtypeStruct((B, 1), jnp.float32),
                   jax.ShapeDtypeStruct((B, 1), jnp.float32)),
        in_specs=[
            pl.BlockSpec(memory_space=pltpu.MemorySpace.SMEM),   # seed
            pl.BlockSpec(memory_space=pltpu.MemorySpace.VMEM),   # idx
            pl.BlockSpec(memory_space=pltpu.MemorySpace.VMEM),   # feature
            pl.BlockSpec(memory_space=pltpu.MemorySpace.VMEM),   # adj
            pl.BlockSpec(memory_space=pltpu.MemorySpace.VMEM),   # W
            pl.BlockSpec(memory_space=pltpu.MemorySpace.VMEM),   # b
        ],
        out_specs=(pl.BlockSpec(memory_space=pltpu.MemorySpace.VMEM),
                   pl.BlockSpec(memory_space=pltpu.MemorySpace.VMEM)),
    )(seed, idx, feature, adj, params["W"], params["b"])
    return out_p[:, 0], out_n[:, 0]


if __name__ == "__main__":
    key = jax.random.PRNGKey(0)
    N, Fin, H = 32, 16, 32          # nodes, input feature dim, hidden dim
    split_dim = 16                  # H = 2 * split_dim (global / category halves)
    B = 8                           # batch of (user, item, cat, price) tuples
    dropout = 0.0                   # keeps the demo deterministic vs. reference
    alpha = 0.5

    keys = jax.random.split(key, 12)
    feature = jax.random.normal(keys[0], (N, Fin), jnp.float32)
    adj = jax.random.uniform(keys[1], (N, N), jnp.float32)
    adj = adj / jnp.sum(adj, axis=1, keepdims=True)     # row-normalized dense adjacency
    W = jax.random.normal(keys[2], (Fin, H), jnp.float32) * 0.1
    b = jax.random.normal(keys[3], (1, H), jnp.float32) * 0.1
    user = jax.random.randint(keys[4], (B,), 0, N, jnp.int32)
    item_p = jax.random.randint(keys[5], (B,), 0, N, jnp.int32)
    item_n = jax.random.randint(keys[6], (B,), 0, N, jnp.int32)
    cat_p = jax.random.randint(keys[7], (B,), 0, N, jnp.int32)
    cat_n = jax.random.randint(keys[8], (B,), 0, N, jnp.int32)
    price_p = jax.random.randint(keys[9], (B,), 0, N, jnp.int32)
    price_n = jax.random.randint(keys[10], (B,), 0, N, jnp.int32)
    seed = jnp.array([0], jnp.int32)

    params = {"W": W, "b": b}

    # --- literal character_GraphConvolution: output = adj @ input ---
    gc_out = character_graph_convolution(feature, adj)
    jax.block_until_ready(gc_out)
    assert jnp.allclose(gc_out, adj @ feature, atol=1e-5), "gc mismatch"

    # --- fused BasePUP forward ---
    pred_p, pred_n = base_pup_forward(
        params, feature, adj, user, item_p, item_n, cat_p, cat_n, price_p, price_n,
        dropout=dropout, alpha=alpha, split_dim=split_dim, seed=seed)
    jax.block_until_ready((pred_p, pred_n))

    # Pure-JAX reference (dropout = 0.0 so encode is deterministic)
    x_ref = jnp.tanh(adj @ (feature @ W) + b)

    def fm_ref(a, bb, c):
        s = a + bb + c
        return jnp.sum(0.5 * (s * s - (a * a + bb * bb + c * c)), axis=1)

    def dec_ref(u, i, c, p):
        ue, ie, ce, pe = x_ref[u], x_ref[i], x_ref[c], x_ref[p]
        g = fm_ref(ue[:, :split_dim], ie[:, :split_dim], pe[:, :split_dim])
        cc = fm_ref(ue[:, split_dim:], ce[:, split_dim:], pe[:, split_dim:])
        return g + alpha * cc

    assert jnp.allclose(pred_p, dec_ref(user, item_p, cat_p, price_p), atol=1e-4), "pred_p mismatch"
    assert jnp.allclose(pred_n, dec_ref(user, item_n, cat_n, price_n), atol=1e-4), "pred_n mismatch"
    print("KERNEL_OK")
</pallas_src>

<mosaic_0001>
module attributes {stable_mosaic.version = 11 : i64} {
  func.func @_gc_kernel(%arg0: memref<32x16xf32, #tpu.memory_space<vmem>>, %arg1: memref<32x32xf32, #tpu.memory_space<vmem>>, %arg2: memref<32x16xf32, #tpu.memory_space<vmem>>) attributes {dimension_semantics = [], scalar_prefetch = 0 : i64, scratch_operands = 0 : i64, tpu.core_type = #tpu.core_type<tc>} {
    %c0 = arith.constant 0 : index
    %c0_0 = arith.constant 0 : index
    %0 = vector.load %arg1[%c0, %c0_0] : memref<32x32xf32, #tpu.memory_space<vmem>>, vector<32x32xf32>
    %c0_1 = arith.constant 0 : index
    %c0_2 = arith.constant 0 : index
    %1 = vector.load %arg0[%c0_1, %c0_2] : memref<32x16xf32, #tpu.memory_space<vmem>>, vector<32x16xf32>
    %cst = arith.constant dense<0.000000e+00> : vector<32x16xf32>
    %2 = tpu.matmul %0, %1, %cst {dimension_numbers = #tpu.dot_dimension_numbers<[1], [0], [0], [1], [0, 0, 1, 1], [], []>} : vector<32x32xf32>, vector<32x16xf32>, vector<32x16xf32> -> vector<32x16xf32>
    %c0_3 = arith.constant 0 : index
    %c0_4 = arith.constant 0 : index
    %3 = vector.load %arg2[%c0_3, %c0_4] : memref<32x16xf32, #tpu.memory_space<vmem>>, vector<32x16xf32>
    tpu.vector_store %arg2[%c0_3, %c0_4], %2 {strides = array<i32>} : memref<32x16xf32, #tpu.memory_space<vmem>>, vector<32x16xf32>,
    return
  }
}

</mosaic_0001>

<llo_original>
// kernel: tpu_custom_call.1
$region0: #{tpu_custom_call.1}
  #allocation0 [shape = 'u32[]', space=smem, size = 0x4, offset = 0x4, fixed_abs, tag = 'smem constant byte address 0x4 - core index']
  #allocation1 [shape = 'u32[144,128]{1,0:T(1,128)}', space=vmem, size = 0x12000, scoped, tag = 'internal scratch']
  %s0 = inlined_call_operand.vmem [shape: f32[32,16], index: 0, kind: input, shape index: {}]
  %s1 = inlined_call_operand.vmem [shape: f32[32,32], index: 1, kind: input, shape index: {}]
  %s2 = inlined_call_operand.vmem [shape: f32[32,16], index: 2, kind: output, shape index: {}]
  %s3 = sld [smem:[#allocation0]]
  $region18: #{tpu_custom_call.1} parent=0
    _
  %s5 = ssub.s32 1, %s3
  %s6 = scalar_select 0, %s5, %s3
  // Predicated region
  $region2: #{tpu_custom_call.1} parent=0 // pred_check
    _
  $region3: #{tpu_custom_call.1} parent=0 // pred_check_branch
    %8 = sbr.rel (0) target = $region5
  $region4: #{tpu_custom_call.1} parent=0 // pred_region
    _
  $region5: #{tpu_custom_call.1} parent=0 // pred_fallthru
    _
  // Predicated region
  $region6: #{tpu_custom_call.1} parent=0 // pred_check
    _
  $region7: #{tpu_custom_call.1} parent=0 // pred_check_branch
    %10 = sbr.rel (0) target = $region9
  $region8: #{tpu_custom_call.1} parent=0 // pred_region
    _
  $region9: #{tpu_custom_call.1} parent=0 // pred_fallthru
    _
  %v11 = vld [vmem:[%s1] sm:$0xff]
  %v12 = vld [vmem:[%s1 + $0x8] sm:$0xff]
  %v13 = vld [vmem:[%s1 + $0x10] sm:$0xff]
  %v14 = vld [vmem:[%s1 + $0x18] sm:$0xff]
  %v15 = vld [vmem:[%s0] sm:$0xff]
  %v16 = vld [vmem:[%s0 + $0x8] sm:$0xff]
  %v17 = vld [vmem:[%s0 + $0x10] sm:$0xff]
  %v18 = vld [vmem:[%s0 + $0x18] sm:$0xff]
  %vm19 = vcmask 261120
  %v21 = vsel %vm19, %v11, 0
  %v24 = vsel %vm19, %v12, 0
  %v27 = vsel %vm19, %v13, 0
  %v30 = vsel %vm19, %v14, 0
  %32 = vmatprep.subr.mxu0 0.0
  %33 = vmatpush1.msra.mxu0 %v15
  %34 = vmatprep.subr.mxu0 0.0
  %35 = vmatpush1.msra.mxu0 %v16
  %36 = vmatprep.subr.mxu0 0.0
  %37 = vmatpush1.msra.mxu0 %v17
  %38 = vmatprep.subr.mxu0 0.0
  %39 = vmatpush1.msra.mxu0 %v18
  %40 = vmatprep.subr.mxu0 0.0
  %41 = vmatpush1.msra.mxu0 0.0
  %42 = vmatprep.subr.mxu0 0.0
  %43 = vmatpush1.msra.mxu0 0.0
  %44 = vmatprep.subr.mxu0 0.0
  %45 = vmatpush1.msra.mxu0 0.0
  %46 = vmatprep.subr.mxu0 0.0
  %47 = vmatpush1.msra.mxu0 0.0
  %48 = vmatprep.subr.mxu0 0.0
  %49 = vmatpush1.msra.mxu0 0.0
  %50 = vmatprep.subr.mxu0 0.0
  %51 = vmatpush1.msra.mxu0 0.0
  %52 = vmatprep.subr.mxu0 0.0
  %53 = vmatpush1.msra.mxu0 0.0
  %54 = vmatprep.subr.mxu0 0.0
  %55 = vmatpush1.msra.mxu0 0.0
  %56 = vmatprep.subr.mxu0 0.0
  %57 = vmatpush1.msra.mxu0 0.0
  %58 = vmatprep.subr.mxu0 0.0
  %59 = vmatpush1.msra.mxu0 0.0
  %60 = vmatprep.subr.mxu0 0.0
  %61 = vmatpush1.msra.mxu0 0.0
  %62 = vmatprep.subr.mxu0 0.0
  %63 = vmatpush1.msra.mxu0 0.0
  %64 = vmatprep.subr.mxu0 0.0
  %65 = vmatpush1.msra.mxu0 0.0
  %66 = vmatprep.subr.mxu0 0.0
  %67 = vmatpush1.msra.mxu0 0.0
  %68 = vmatprep.subr.mxu0 0.0
  %69 = vmatpush1.msra.mxu0 0.0
  %70 = vmatprep.subr.mxu0 0.0
  %71 = vmatpush1.msra.mxu0 0.0
  %72 = vmatprep.subr.mxu0 0.0
  %73 = vmatpush1.msra.mxu0 0.0
  %74 = vmatprep.subr.mxu0 0.0
  %75 = vmatpush1.msra.mxu0 0.0
  %76 = vmatprep.subr.mxu0 0.0
  %77 = vmatpush1.msra.mxu0 0.0
  %78 = vmatprep.subr.mxu0 0.0
  %79 = vmatpush1.msra.mxu0 0.0
  %80 = vmatprep.subr.mxu0 0.0
  %81 = vmatpush1.msra.mxu0 0.0
  %82 = vmatprep.subr.mxu0 0.0
  %83 = vmatpush1.msra.mxu0 0.0
  %84 = vmatprep.subr.mxu0 0.0
  %85 = vmatpush1.msra.mxu0 0.0
  %86 = vmatprep.subr.mxu0 0.0
  %87 = vmatpush1.msra.mxu0 0.0
  %88 = vmatprep.subr.mxu0 0.0
  %89 = vmatpush1.msra.mxu0 0.0
  %90 = vmatprep.subr.mxu0 0.0
  %91 = vmatpush1.msra.mxu0 0.0
  %92 = vmatprep.subr.mxu0 0.0
  %93 = vmatpush1.msra.mxu0 0.0
  %94 = vmatprep.subr.mxu0 0.0
  %95 = vmatpush1.msra.mxu0 0.0
  %96 = vmatprep.mubr.f32.mxu0 0.0
  %97 = vmatmul.mubr.f32.gmra.mrb[0].mxu0 %v21
  %v98 = vpop.f32.mrb[0].mxu0
  %v99 = vadd.f32 0.0, %v98
  %v100 = vpop.f32.mrb[0].mxu0
  %101 = vmatprep.mubr.f32.mxu0 0.0
  %102 = vmatmul.mubr.f32.gmra.mrb[0].mxu0 %v24
  %v103 = vpop.f32.mrb[0].mxu0
  %v104 = vadd.f32 0.0, %v103
  %v105 = vpop.f32.mrb[0].mxu0
  %106 = vmatprep.mubr.f32.mxu0 0.0
  %107 = vmatmul.mubr.f32.gmra.mrb[0].mxu0 %v27
  %v108 = vpop.f32.mrb[0].mxu0
  %v109 = vadd.f32 0.0, %v108
  %v110 = vpop.f32.mrb[0].mxu0
  %111 = vmatprep.mubr.f32.mxu0 0.0
  %112 = vmatmul.mubr.f32.gmra.mrb[0].mxu0 %v30
  %v113 = vpop.f32.mrb[0].mxu0
  %v114 = vadd.f32 0.0, %v113
  %v115 = vpop.f32.mrb[0].mxu0
  %116 = vdwg.mxu0
  %vm117 = vcmask 130048
  %118 = vst.msk [vmem:[%s2] sm:$0xff] %vm117, %v99
  %119 = vst.msk [vmem:[%s2 + $0x8] sm:$0xff] %vm117, %v104
  %120 = vst.msk [vmem:[%s2 + $0x10] sm:$0xff] %vm117, %v109
  %121 = vst.msk [vmem:[%s2 + $0x18] sm:$0xff] %vm117, %v114
  // Predicated region
  $region10: #{tpu_custom_call.1} parent=0 // pred_check
    _
  $region11: #{tpu_custom_call.1} parent=0 // pred_check_branch
    %123 = sbr.rel (0) target = $region13
  $region12: #{tpu_custom_call.1} parent=0 // pred_region
    _
  $region13: #{tpu_custom_call.1} parent=0 // pred_fallthru
    _
  // Predicated region
  $region14: #{tpu_custom_call.1} parent=0 // pred_check
    _
  $region15: #{tpu_custom_call.1} parent=0 // pred_check_branch
    %125 = sbr.rel (0) target = $region17
  $region16: #{tpu_custom_call.1} parent=0 // pred_region
    _
  $region17: #{tpu_custom_call.1} parent=0 // pred_fallthru
    _

</llo_original>
